<compile_context>
chip_gen: v7x
topology: tpu7x:2x2x1
jax: 0.10.0
libtpu: 0.0.40
codegen_flags: <defaults>
</compile_context>

<pallas_src>
import functools
import math

import jax
import jax.numpy as jnp
from jax.experimental import pallas as pl
from jax.experimental.pallas import tpu as pltpu


# --------------------------------------------------------------------------
# Tiling helpers
# --------------------------------------------------------------------------
def _round_up(n: int, m: int) -> int:
    return ((n + m - 1) // m) * m


def _vmem_budget_bytes() -> int:
    """Budget for the double-buffered tile working set of one kernel."""
    try:
        cap = int(pltpu.get_tpu_info().vmem_capacity_bytes)
        # ~1/3 of physical VMEM for pipelined tiles, rest = headroom/scratch.
        return max(16 << 20, min(48 << 20, cap // 3))
    except Exception:
        return 24 << 20   # conservative: fits v5e/v6e (128 MiB) and v7x (64 MiB)


def _pick_tile_rows(n: int, d: int, itemsize: int, n_streams: int,
                    max_rows: int = 2048) -> int:
    """Largest row tile whose double-buffered footprint fits the VMEM budget."""
    align = 8 if itemsize >= 4 else (16 if itemsize == 2 else 32)
    if n <= align:
        return n
    per_row = max(1, n_streams * 2 * d * itemsize)      # 2 = double buffering
    tm = min(max_rows, _vmem_budget_bytes() // per_row)
    # Keep >= 2 grid steps when there is enough work (v7x has 2 TensorCores).
    if n >= 4 * align:
        tm = min(tm, _round_up(-(-n // 2), align))
    tm = max(align, (tm // align) * align)
    return n if tm >= n else tm


def _lane_dense_shape(n: int, d: int):
    """Lane-dense (multiple-of-128 last dim) view for elementwise kernels."""
    if d % 128 == 0:
        return n, d
    total = n * d
    best = None
    for lanes in (1024, 512, 256, 128):
        if total % lanes == 0:
            if best is None:
                best = (total // lanes, lanes)
            if total // lanes >= 8:
                return total // lanes, lanes
    return best if best is not None else (n, d)


def _mosaic_params(footprint_bytes: int) -> pltpu.CompilerParams:
    vmem_limit = min(48 << 20, max(32 << 20, footprint_bytes + (8 << 20)))
    return pltpu.CompilerParams(dimension_semantics=("parallel",),
                                vmem_limit_bytes=vmem_limit)


# --------------------------------------------------------------------------
# Kernel 1: fused LayerNorm over the feature (lane) axis.
# PyTorch semantics: a_2 * (x - mean) / (std + eps) + b_2 with *unbiased*
# std (torch.Tensor.std default, ddof=1) and eps added to std.
# --------------------------------------------------------------------------
def _layernorm_kernel(x_ref, a_ref, b_ref, o_ref, *, eps):
    x = x_ref[...].astype(jnp.float32)                       # (tm, D)
    d = x.shape[-1]
    mean = jnp.mean(x, axis=-1, keepdims=True)
    xc = x - mean
    var = jnp.sum(xc * xc, axis=-1, keepdims=True) * (1.0 / (d - 1))
    inv = 1.0 / (jnp.sqrt(var) + jnp.float32(eps))           # per-row (tm, 1)
    y = (xc * inv) * a_ref[...].astype(jnp.float32) + b_ref[...].astype(jnp.float32)
    o_ref[...] = y.astype(o_ref.dtype)


@functools.partial(jax.jit, static_argnames=("eps",))
def layer_norm_pallas(x2, a_2, b_2, *, eps=1e-6):
    n, d = x2.shape
    itemsize = x2.dtype.itemsize
    tm = _pick_tile_rows(n, d, itemsize, n_streams=2)         # x + out
    footprint = 2 * 2 * tm * d * itemsize + 2 * d * 4
    return pl.pallas_call(
        functools.partial(_layernorm_kernel, eps=eps),
        out_shape=jax.ShapeDtypeStruct((n, d), x2.dtype),
        grid_spec=pltpu.PrefetchScalarGridSpec(
            num_scalar_prefetch=0,
            grid=(pl.cdiv(n, tm),),
            in_specs=[
                pl.BlockSpec((tm, d), lambda i: (i, 0)),
                pl.BlockSpec((1, d), lambda i: (0, 0)),       # a_2 (resident)
                pl.BlockSpec((1, d), lambda i: (0, 0)),       # b_2 (resident)
            ],
            out_specs=pl.BlockSpec((tm, d), lambda i: (i, 0)),
        ),
        compiler_params=_mosaic_params(footprint),
    )(x2, a_2.reshape(1, d), b_2.reshape(1, d))


# --------------------------------------------------------------------------
# Kernel 2a: residual add (eval mode / p == 0): out = x + sub
# --------------------------------------------------------------------------
def _residual_add_kernel(x_ref, s_ref, o_ref):
    o_ref[...] = (x_ref[...].astype(jnp.float32)
                  + s_ref[...].astype(jnp.float32)).astype(o_ref.dtype)


@jax.jit
def residual_add_pallas(x2, s2):
    n, d = x2.shape
    n2, d2 = _lane_dense_shape(n, d)
    xr, sr = x2.reshape(n2, d2), s2.reshape(n2, d2)
    itemsize = x2.dtype.itemsize
    tm = _pick_tile_rows(n2, d2, itemsize, n_streams=3)       # x + s + out
    footprint = 3 * 2 * tm * d2 * itemsize
    out = pl.pallas_call(
        _residual_add_kernel,
        out_shape=jax.ShapeDtypeStruct((n2, d2), x2.dtype),
        grid_spec=pltpu.PrefetchScalarGridSpec(
            num_scalar_prefetch=0,
            grid=(pl.cdiv(n2, tm),),
            in_specs=[
                pl.BlockSpec((tm, d2), lambda i: (i, 0)),
                pl.BlockSpec((tm, d2), lambda i: (i, 0)),
            ],
            out_specs=pl.BlockSpec((tm, d2), lambda i: (i, 0)),
        ),
        input_output_aliases={0: 0},                          # x is dead after
        compiler_params=_mosaic_params(footprint),
    )(xr, sr)
    return out.reshape(n, d)


# --------------------------------------------------------------------------
# Kernel 2b: fused dropout + residual add (training, 0 < p < 1):
#   out = x + where(keep, sub / (1 - p), 0)
# Randomness: portable counter-based ARX hash (add/xor/rotate) keyed on
# (seed, global element coordinates) -> mask is tile-size independent.
# --------------------------------------------------------------------------
def _rotl32(x, r):
    return (x << jnp.uint32(r)) | (x >> jnp.uint32(32 - r))


def _hash_bits_u32(rows_u32, cols_u32, seed_u32):
    k0 = seed_u32
    k1 = seed_u32 ^ jnp.uint32(0x1BD11BDA)
    x0 = rows_u32 + k0
    x1 = (cols_u32 ^ jnp.uint32(0x9E3779B9)) + k1
    for r in (13, 15, 26, 6, 17, 29, 16, 24):                 # threefry-style ARX
        x0 = x0 + x1
        x1 = _rotl32(x1, r) ^ x0
    return x0 + x1


def _residual_dropout_kernel(seed_ref, x_ref, s_ref, o_ref, *, keep_cut, scale):
    tm, d = s_ref.shape
    row0 = pl.program_id(0) * tm
    rows = (jax.lax.broadcasted_iota(jnp.int32, (tm, d), 0) + row0).astype(jnp.uint32)
    cols = jax.lax.broadcasted_iota(jnp.int32, (tm, d), 1).astype(jnp.uint32)
    seed = seed_ref[0].astype(jnp.uint32)
    bits = _hash_bits_u32(rows, cols, seed).astype(jnp.int32)  # wrap to int32
    keep = bits >= jnp.int32(keep_cut)                         # P(keep)=1-p
    s_scaled = s_ref[...].astype(jnp.float32) * jnp.float32(scale)
    out = x_ref[...].astype(jnp.float32) + jnp.where(keep, s_scaled, jnp.float32(0.0))
    o_ref[...] = out.astype(o_ref.dtype)


@functools.partial(jax.jit, static_argnames=("dropout_p",))
def residual_dropout_pallas(x2, s2, seed, *, dropout_p):
    n, d = x2.shape
    n2, d2 = _lane_dense_shape(n, d)
    xr, sr = x2.reshape(n2, d2), s2.reshape(n2, d2)
    itemsize = x2.dtype.itemsize
    tm = _pick_tile_rows(n2, d2, itemsize, n_streams=3)
    footprint = 3 * 2 * tm * d2 * itemsize
    # Signed-int32 threshold: uniform bits >= cut happens with prob (1 - p).
    keep_cut = int(round((2.0 * float(dropout_p) - 1.0) * 2147483648.0))
    keep_cut = max(-(2 ** 31), min(2 ** 31 - 1, keep_cut))
    scale = 1.0 / (1.0 - float(dropout_p))
    out = pl.pallas_call(
        functools.partial(_residual_dropout_kernel,
                          keep_cut=keep_cut, scale=scale),
        out_shape=jax.ShapeDtypeStruct((n2, d2), x2.dtype),
        grid_spec=pltpu.PrefetchScalarGridSpec(
            num_scalar_prefetch=1,                            # seed -> SMEM
            grid=(pl.cdiv(n2, tm),),
            in_specs=[
                pl.BlockSpec((tm, d2), lambda i, seed_ref: (i, 0)),
                pl.BlockSpec((tm, d2), lambda i, seed_ref: (i, 0)),
            ],
            out_specs=pl.BlockSpec((tm, d2), lambda i, seed_ref: (i, 0)),
        ),
        input_output_aliases={1: 0},   # operand 0 is the prefetched seed; 1 = x
        compiler_params=_mosaic_params(footprint),
    )(seed, xr, sr)
    return out.reshape(n, d)


# --------------------------------------------------------------------------
# SublayerConnection.forward:  x + dropout(sublayer(LayerNorm(x)))
# --------------------------------------------------------------------------
def sublayer_connection_forward(x, a_2, b_2, sublayer_fn, *,
                                dropout_p=0.0, training=False, seed=0,
                                eps=1e-6):
    lead = x.shape[:-1]
    d = x.shape[-1]
    n = int(math.prod(lead)) if lead else 1
    x2 = x.reshape(n, d)

    normed = layer_norm_pallas(x2, a_2, b_2, eps=eps)
    # TODO(synk): an arbitrary `sublayer` callable cannot be fused into a
    # single Pallas kernel; when the sublayer is a known matmul, fuse the
    # dropout+residual as its epilogue to save one (N, D) HBM round trip.
    sub = sublayer_fn(normed.reshape(*lead, d)).reshape(n, d)

    if training and dropout_p > 0.0:
        if dropout_p >= 1.0:
            out2 = x2                                  # everything dropped
        else:
            seed_arr = jnp.asarray([seed], dtype=jnp.int32)
            out2 = residual_dropout_pallas(x2, sub, seed_arr,
                                           dropout_p=float(dropout_p))
    else:
        out2 = residual_add_pallas(x2, sub)
    return out2.reshape(*lead, d)


if __name__ == "__main__":
    # Small shapes consistent with the module: x (batch, seq, d_model).
    batch, seq, d_model = 2, 8, 32
    dropout_p = 0.1
    eps = 1e-6

    key = jax.random.PRNGKey(0)
    kx, kw, kb = jax.random.split(key, 3)
    x = jax.random.normal(kx, (batch, seq, d_model), dtype=jnp.float32)

    # LayerNorm parameters (module init: ones / zeros).
    a_2 = jnp.ones((d_model,), jnp.float32)
    b_2 = jnp.zeros((d_model,), jnp.float32)

    # Demo sublayer: a position-wise linear layer (arbitrary JAX callable).
    bound = 1.0 / math.sqrt(d_model)
    w = jax.random.uniform(kw, (d_model, d_model),
                           minval=-bound, maxval=bound, dtype=jnp.float32)
    b_sub = jax.random.uniform(kb, (d_model,),
                               minval=-bound, maxval=bound, dtype=jnp.float32)
    sublayer_fn = lambda h: h @ w + b_sub

    # --- eval mode (dropout = identity): exact check vs pure-JAX reference ---
    out_eval = sublayer_connection_forward(
        x, a_2, b_2, sublayer_fn, dropout_p=dropout_p, training=False, eps=eps)
    jax.block_until_ready(out_eval)

    def layernorm_ref(h):
        mean = h.mean(-1, keepdims=True)
        var = ((h - mean) ** 2).sum(-1, keepdims=True) / (h.shape[-1] - 1)
        return a_2 * (h - mean) / (jnp.sqrt(var) + eps) + b_2

    sub_ref = sublayer_fn(layernorm_ref(x))
    ref_eval = x + sub_ref
    assert out_eval.shape == x.shape
    assert jnp.allclose(out_eval, ref_eval, atol=1e-5, rtol=1e-5)

    # --- training mode: dropout active inside the fused residual kernel ---
    out_train = sublayer_connection_forward(
        x, a_2, b_2, sublayer_fn, dropout_p=dropout_p, training=True,
        seed=1234, eps=eps)
    jax.block_until_ready(out_train)

    kept_ref = x + sub_ref / (1.0 - dropout_p)   # value if element is kept
    dropped_ref = x                              # value if element is dropped
    is_kept = jnp.isclose(out_train, kept_ref, atol=1e-4, rtol=1e-4)
    is_dropped = jnp.isclose(out_train, dropped_ref, atol=1e-4, rtol=1e-4)
    assert bool(jnp.all(is_kept | is_dropped))
    assert bool(jnp.all(jnp.isfinite(out_train)))
    # Dropout should actually drop something, but far less than half (p=0.1).
    n_dropped = int(jnp.sum(is_dropped & ~is_kept))
    total = out_train.size
    assert 1 <= n_dropped <= total // 2

    print("KERNEL_OK")
</pallas_src>

<mosaic_0001>
module attributes {stable_mosaic.version = 11 : i64} {
  func.func @_layernorm_kernel(%arg0: i32, %arg1: memref<16x32xf32, #tpu.memory_space<vmem>>, %arg2: memref<1x32xf32, #tpu.memory_space<vmem>>, %arg3: memref<1x32xf32, #tpu.memory_space<vmem>>, %arg4: memref<16x32xf32, #tpu.memory_space<vmem>>) attributes {dimension_semantics = [#tpu.dimension_semantics<parallel>], iteration_bounds = array<i64: 1>, scalar_prefetch = 0 : i64, scratch_operands = 0 : i64, tpu.core_type = #tpu.core_type<tc>, window_params = [{transform_indices = @transform_0, window_bounds = array<i64: 16, 32>}, {pipeline_mode = #tpu.pipeline_mode<synchronous>, transform_indices = @transform_1, window_bounds = array<i64: 1, 32>}, {pipeline_mode = #tpu.pipeline_mode<synchronous>, transform_indices = @transform_2, window_bounds = array<i64: 1, 32>}, {transform_indices = @transform_3, window_bounds = array<i64: 16, 32>}]} {
    %c0 = arith.constant 0 : index
    %c0_0 = arith.constant 0 : index
    %0 = vector.load %arg1[%c0, %c0_0] : memref<16x32xf32, #tpu.memory_space<vmem>>, vector<16x32xf32>
    %cst = arith.constant dense<0.000000e+00> : vector<16xf32>
    %1 = vector.multi_reduction <add>, %0, %cst [1] : vector<16x32xf32> to vector<16xf32>
    %2 = vector.shape_cast %1 : vector<16xf32> to vector<16x1xf32>
    %cst_1 = arith.constant 3.200000e+01 : f32
    %3 = vector.broadcast %cst_1 : f32 to vector<16x1xf32>
    %4 = arith.divf %2, %3 : vector<16x1xf32>
    %5 = vector.broadcast %4 : vector<16x1xf32> to vector<16x32xf32>
    %6 = arith.subf %0, %5 : vector<16x32xf32>
    %7 = arith.mulf %6, %6 : vector<16x32xf32>
    %cst_2 = arith.constant dense<0.000000e+00> : vector<16xf32>
    %8 = vector.multi_reduction <add>, %7, %cst_2 [1] : vector<16x32xf32> to vector<16xf32>
    %9 = vector.shape_cast %8 : vector<16xf32> to vector<16x1xf32>
    %cst_3 = arith.constant 0.0322580636 : f32
    %10 = vector.broadcast %cst_3 : f32 to vector<16x1xf32>
    %11 = arith.mulf %9, %10 : vector<16x1xf32>
    %12 = math.sqrt %11 : vector<16x1xf32>
    %cst_4 = arith.constant 9.99999997E-7 : f32
    %13 = vector.broadcast %cst_4 : f32 to vector<16x1xf32>
    %14 = arith.addf %12, %13 : vector<16x1xf32>
    %cst_5 = arith.constant 1.000000e+00 : f32
    %15 = vector.broadcast %cst_5 : f32 to vector<16x1xf32>
    %16 = arith.divf %15, %14 : vector<16x1xf32>
    %17 = vector.broadcast %16 : vector<16x1xf32> to vector<16x32xf32>
    %18 = arith.mulf %6, %17 : vector<16x32xf32>
    %c0_6 = arith.constant 0 : index
    %c0_7 = arith.constant 0 : index
    %19 = vector.load %arg2[%c0_6, %c0_7] : memref<1x32xf32, #tpu.memory_space<vmem>>, vector<1x32xf32>
    %20 = vector.broadcast %19 : vector<1x32xf32> to vector<16x32xf32>
    %21 = arith.mulf %18, %20 : vector<16x32xf32>
    %c0_8 = arith.constant 0 : index
    %c0_9 = arith.constant 0 : index
    %22 = vector.load %arg3[%c0_8, %c0_9] : memref<1x32xf32, #tpu.memory_space<vmem>>, vector<1x32xf32>
    %23 = vector.broadcast %22 : vector<1x32xf32> to vector<16x32xf32>
    %24 = arith.addf %21, %23 : vector<16x32xf32>
    %c0_10 = arith.constant 0 : index
    %c0_11 = arith.constant 0 : index
    %25 = vector.load %arg4[%c0_10, %c0_11] : memref<16x32xf32, #tpu.memory_space<vmem>>, vector<16x32xf32>
    tpu.vector_store %arg4[%c0_10, %c0_11], %24 {strides = array<i32>} : memref<16x32xf32, #tpu.memory_space<vmem>>, vector<16x32xf32>,
    return
  }
  func.func @transform_0(%arg0: i32) -> (i32, i32) {
    %c0_i32 = arith.constant 0 : i32
    %c0_i32_0 = arith.constant 0 : i32
    return %arg0, %c0_i32 : i32, i32
  }
  func.func @transform_1(%arg0: i32) -> (i32, i32) {
    %c0_i32 = arith.constant 0 : i32
    %c0_i32_0 = arith.constant 0 : i32
    %c0_i32_1 = arith.constant 0 : i32
    return %c0_i32, %c0_i32_0 : i32, i32
  }
  func.func @transform_2(%arg0: i32) -> (i32, i32) {
    %c0_i32 = arith.constant 0 : i32
    %c0_i32_0 = arith.constant 0 : i32
    %c0_i32_1 = arith.constant 0 : i32
    return %c0_i32, %c0_i32_0 : i32, i32
  }
  func.func @transform_3(%arg0: i32) -> (i32, i32) {
    %c0_i32 = arith.constant 0 : i32
    %c0_i32_0 = arith.constant 0 : i32
    return %arg0, %c0_i32 : i32, i32
  }
}

</mosaic_0001>

<llo_original>
// kernel: layer_norm_pallas.1
$region0: #{layer_norm_pallas.1}
  #allocation0 [shape = 'u32[]', space=smem, size = 0x4, offset = 0x4, fixed_abs, tag = 'smem constant byte address 0x4 - core index']
  #allocation1 [shape = 'u32[144,128]{1,0:T(1,128)}', space=vmem, size = 0x12000, scoped, tag = 'internal scratch']
  %s0 = inlined_call_operand.hbm [shape: f32[16,32], index: 0, kind: input, shape index: {}]
  %s1 = inlined_call_operand.vmem [shape: f32[1,32], index: 1, kind: input, shape index: {}]
  %s2 = inlined_call_operand.vmem [shape: f32[1,32], index: 2, kind: input, shape index: {}]
  %s3 = inlined_call_operand.hbm [shape: f32[16,32], index: 3, kind: output, shape index: {}]
  %s4 = sld [smem:[#allocation0]]
  $region26: #{layer_norm_pallas.1} parent=0
    _
  %s6 = ssub.s32 1, %s4
  %s7 = scalar_select 0, %s6, %s4
  $region1: #{layer_norm_pallas.1} parent=0
    #allocation2 [shape = 'u8[8192]{0}', space=vmem, size = 0x2000, scoped, tag = 'input window, operand 0, single buffered']
    #allocation3 [shape = 's32[1]{0}', space=sflag, size = 0x4, scoped, tag = 'scoped memory for layer_norm_pallas.1']
    #allocation4 [shape = 's32[1]{0}', space=sflag, size = 0x4, scoped, tag = 'scoped memory for layer_norm_pallas.1']
    #allocation5 [shape = 'u8[8192]{0}', space=vmem, size = 0x2000, scoped, tag = 'output window, operand 0, single buffered']
    %8 = vsyncpa [#allocation3], 0
    %9 = vsyncpa [#allocation4], 0
    // Predicated region
    $region2: #{layer_norm_pallas.1} parent=1 // pred_check
      _
    $region3: #{layer_norm_pallas.1} parent=1 // pred_check_branch
      %11 = sbr.rel (0) target = $region5
    $region4: #{layer_norm_pallas.1} parent=1 // pred_region
      %s13 = ssub.s32 256, 256
      %14 = vsyncadd [#allocation3], %s13
      %s15 = sshll.u32 [#allocation2], 4
      %s16 = int_to_ptr.vmem [resolvable:$true] %s15
      %21 = dma.hbm_to_vmem [thread:$0]  %s0, 256, %s16, [#allocation3], 128, 128, 8
    $region5: #{layer_norm_pallas.1} parent=1 // pred_fallthru
      _
    // Predicated region
    $region6: #{layer_norm_pallas.1} parent=1 // pred_check
      _
    $region7: #{layer_norm_pallas.1} parent=1 // pred_check_branch
      %23 = sbr.rel (0) target = $region9
    $region8: #{layer_norm_pallas.1} parent=1 // pred_region
      _
    $region9: #{layer_norm_pallas.1} parent=1 // pred_fallthru
      _
    // Predicated region
    $region10: #{layer_norm_pallas.1} parent=1 // pred_check
      _
    $region11: #{layer_norm_pallas.1} parent=1 // pred_check_branch
      %25 = sbr.rel (0) target = $region13
    $region12: #{layer_norm_pallas.1} parent=1 // pred_region
      _
    $region13: #{layer_norm_pallas.1} parent=1 // pred_fallthru
      _
    // Predicated region
    $region14: #{layer_norm_pallas.1} parent=1 // pred_check
      _
    $region15: #{layer_norm_pallas.1} parent=1 // pred_check_branch
      %27 = sbr.rel (0) target = $region17
    $region16: #{layer_norm_pallas.1} parent=1 // pred_region
      %28 = dma.done [#allocation3], 256
    $region17: #{layer_norm_pallas.1} parent=1 // pred_fallthru
      _
    %v29 = vld [vmem:[#allocation2] sm:$0xff]
    %v30 = vld [vmem:[#allocation2 + $0x8] sm:$0xff]
    %vm31 = vcmask 261120
    %v32 = vsel %vm31, %v29, 0.0
    %33 = vadd.xlane.f32.xlu0 %v32
    %v34 = vpop.xlane.xlu0 %33
    %v35 = vsel %vm31, %v30, 0.0
    %36 = vadd.xlane.f32.xlu0 %v35
    %v37 = vpop.xlane.xlu0 %36
    %v38 = vrcp.pop 32.0
    %v39 = vmul.f32 %v34, %v38
    %v40 = vmul.f32 %v37, %v38
    %v41 = vsub.f32 %v29, %v39
    %v42 = vsub.f32 %v30, %v40
    %v43 = vmul.f32 %v41, %v41
    %v44 = vmul.f32 %v42, %v42
    %v45 = vsel %vm31, %v43, 0.0
    %46 = vadd.xlane.f32.xlu0 %v45
    %v47 = vpop.xlane.xlu0 %46
    %v48 = vsel %vm31, %v44, 0.0
    %49 = vadd.xlane.f32.xlu0 %v48
    %v50 = vpop.xlane.xlu0 %49
    %v51 = vmul.f32 %v47, 0.032258064
    %v52 = vmul.f32 %v50, 0.032258064
    %v53 = vrsqrt.pop %v51
    %v54 = vmul.f32 %v51, %v53
    %vm55 = vcmp.eq.f32.partialorder %v51, inf
    %v56 = vsel %vm55, %v51, %v54
    %vm57 = vcmp.eq.f32.partialorder %v51, 0.0
    %v58 = vand.u32 %v51, 2147483648
    %v59 = vsel %vm57, %v58, %v56
    %v60 = vrsqrt.pop %v52
    %v61 = vmul.f32 %v52, %v60
    %vm62 = vcmp.eq.f32.partialorder %v52, inf
    %v63 = vsel %vm62, %v52, %v61
    %vm64 = vcmp.eq.f32.partialorder %v52, 0.0
    %v65 = vand.u32 %v52, 2147483648
    %v66 = vsel %vm64, %v65, %v63
    %v67 = vadd.f32 %v59, 1e-06
    %v68 = vadd.f32 %v66, 1e-06
    %v69 = vrcp.pop %v67
    %v70 = vmul.f32 1.0, %v69
    %v71 = vrcp.pop %v68
    %v72 = vmul.f32 1.0, %v71
    %v73 = vmul.f32 %v41, %v70
    %v74 = vmul.f32 %v42, %v72
    %v75 = vld [vmem:[%s1] sm:$0x1]
    %v77 = vlaneseq
    %v78 = vshrl.u32 %v77, 7
    %v79 = vsub.s32 0, %v78
    %v80 = vrot.slane %v75, %v79
    %v82 = vmul.f32 %v73, %v80
    %v83 = vmul.f32 %v74, %v80
    %v84 = vld [vmem:[%s2] sm:$0x1]
    %v86 = vlaneseq
    %v87 = vshrl.u32 %v86, 7
    %v88 = vsub.s32 0, %v87
    %v89 = vrot.slane %v84, %v88
    %v91 = vadd.f32 %v82, %v89
    %v92 = vadd.f32 %v83, %v89
    %93 = vst.msk [vmem:[#allocation5] sm:$0xff] %vm31, %v91
    %94 = vst.msk [vmem:[#allocation5 + $0x8] sm:$0xff] %vm31, %v92
    // Predicated region
    $region18: #{layer_norm_pallas.1} parent=1 // pred_check
      _
    $region19: #{layer_norm_pallas.1} parent=1 // pred_check_branch
      %96 = sbr.rel (0) target = $region21
    $region20: #{layer_norm_pallas.1} parent=1 // pred_region
      %s98 = ssub.s32 256, 256
      %99 = vsyncadd [#allocation4], %s98
      %s100 = sshll.u32 [#allocation5], 4
      %s101 = int_to_ptr.vmem [resolvable:$true] %s100
      %106 = dma.vmem_to_hbm [thread:$0]  %s101, 256, %s3, [#allocation4], 128, 128, 8
    $region21: #{layer_norm_pallas.1} parent=1 // pred_fallthru
      _
    // Predicated region
    $region22: #{layer_norm_pallas.1} parent=1 // pred_check
      _
    $region23: #{layer_norm_pallas.1} parent=1 // pred_check_branch
      %108 = sbr.rel (0) target = $region25
    $region24: #{layer_norm_pallas.1} parent=1 // pred_region
      %109 = dma.done [#allocation4], 256
    $region25: #{layer_norm_pallas.1} parent=1 // pred_fallthru
      _
    %110 = vsyncpa [#allocation3], 1
    %111 = vsyncpa [#allocation4], 1

</llo_original>
